<compile_context>
chip_gen: v5e
topology: v5e:2x2
jax: 0.10.0
libtpu: 0.0.40
codegen_flags: <defaults>
</compile_context>

<pallas_src>
import jax
import jax.numpy as jnp
from jax.experimental import pallas as pl
from jax.experimental.pallas import tpu as pltpu

_LANE = 128


def _round_up(x, m):
    return ((x + m - 1) // m) * m


def attention_kernel(enc_ref, x_ref, len_ref, wl_ref, b_ref, wa_ref,
                     out_ref, att_ref):
    """One grid step == `TB` batch rows, processed in row chunks of <=256.

    enc_ref: (TB, S*D)  lane-packed enc_sents
    x_ref  : (TB, S*H)  lane-packed enc_sent_com_attent
    len_ref: (TB, 1)    int32 lengths
    wl_ref : (S*H, S*A) block-diagonal W_lin   (resident)
    b_ref  : (1, S*A)   b_lin tiled S times    (resident)
    wa_ref : (S*A, S)   block-diagonal w_att   (resident)
    out_ref: (TB, D)    attended
    att_ref: (TB, S)    masked softmax
    """
    TB = x_ref.shape[0]
    S = wa_ref.shape[1]
    D = enc_ref.shape[1] // S

    RC = min(TB, 256)            # row sub-tile: bounds vreg live ranges
    n_chunks = TB // RC          # wrapper guarantees TB % RC == 0

    def compute_chunk(c):
        r0 = c * RC
        if not isinstance(r0, int):
            r0 = pl.multiple_of(r0, RC)
        rows = pl.ds(r0, RC)

        # ---- emb = tanh(x @ W_lin + b) for all S positions in ONE dense MXU
        # matmul (K = S*H, N = S*A): lane-dense vregs -> S x fewer EUP pushes.
        x = x_ref[rows, :]                                        # (RC, S*H)
        emb = jnp.tanh(
            jnp.dot(x, wl_ref[...], preferred_element_type=jnp.float32)
            + b_ref[...])                                         # (RC, S*A)

        # ---- logits[:, s] = emb[:, s*A:(s+1)*A] @ w_att via block-diag matmul
        logits = jnp.dot(emb, wa_ref[...],
                         preferred_element_type=jnp.float32)      # (RC, S)

        # ---- masked softmax: exp first, then mask, +1e-4 denom (PyTorch ref)
        lens = len_ref[rows, :]                                   # (RC, 1)
        pos = jax.lax.broadcasted_iota(jnp.int32, (RC, S), 1)
        mask = (pos < lens).astype(jnp.float32)
        e = jnp.exp(logits) * mask
        denom = jnp.sum(e, axis=-1, keepdims=True) + 1e-4
        inv = pl.reciprocal(denom, approx=True)                   # EUP slot
        inv = inv * (2.0 - denom * inv)                           # Newton -> ~f32 exact
        att = e * inv                                             # (RC, S)
        att_ref[rows, :] = att

        # ---- attended = sum_s att[:, s] * enc[:, s, :] as a running
        # accumulation over static lane slices: live set stays (RC, D) instead
        # of a (RC, S, D) lane-padded broadcast temporary.
        enc = enc_ref[rows, :]                                    # (RC, S*D)
        acc = att[:, 0:1] * enc[:, 0:D]
        for s in range(1, S):
            acc = acc + att[:, s:s + 1] * enc[:, s * D:(s + 1) * D]
        out_ref[rows, :] = acc

    if n_chunks == 1:
        compute_chunk(0)
    else:
        def body(c, carry):
            compute_chunk(c)
            return carry
        jax.lax.fori_loop(0, n_chunks, body, 0, unroll=n_chunks <= 8)


def attention_forward(enc_sents, enc_sent_com_attent, len_s,
                      w_lin, b_lin, w_att, *, batch_tile=2048):
    B, S, D = enc_sents.shape
    H = enc_sent_com_attent.shape[-1]
    A = w_lin.shape[-1]
    f32 = jnp.float32

    # ---- lane-dense packed inputs (free, contiguous reshapes in HBM) ----
    enc_p = enc_sents.astype(f32).reshape(B, S * D)
    x_p = enc_sent_com_attent.astype(f32).reshape(B, S * H)
    len_col = len_s.astype(jnp.int32).reshape(B, 1)

    # ---- block-diagonal packed weights (built once, resident in VMEM) ----
    eye = jnp.eye(S, dtype=f32)
    w_bd = jnp.kron(eye, w_lin.astype(f32))                       # (S*H, S*A)
    wa_bd = jnp.kron(eye, w_att.astype(f32).reshape(A, 1))        # (S*A, S)
    b_tiled = jnp.tile(b_lin.astype(f32).reshape(1, A), (1, S))   # (1, S*A)

    # ---- batch tiling: big tiles amortize ~0.35us/grid-step overhead ----
    # per-row VMEM bytes (double-buffered tiles, lane-padded to 128):
    cols_pad = (_round_up(S * D, _LANE) + _round_up(S * H, _LANE)   # enc, x
                + _LANE                                             # lengths
                + _round_up(D, _LANE) + _round_up(S, _LANE))        # out, att
    per_row_bytes = 2 * 4 * cols_pad

    rc_base = 256
    b8 = _round_up(B, 8)
    if b8 <= rc_base:
        tb = b8                      # single chunk, single grid step
    else:
        tb = max(rc_base, (int(batch_tile) // rc_base) * rc_base)
        # VMEM cap (~28 MiB of streamed tiles: safe on v5e/v6e/v7x scoped VMEM)
        cap_rows = (28 * (1 << 20)) // per_row_bytes
        tb = min(tb, max(rc_base, (cap_rows // rc_base) * rc_base))
        # keep >= 2 grid steps when possible so "parallel" can use both v7x TCs
        tb = min(tb, max(rc_base, _round_up((B + 1) // 2, rc_base)))
    b_pad = _round_up(B, tb)

    if b_pad != B:
        pad = b_pad - B
        enc_p = jnp.pad(enc_p, ((0, pad), (0, 0)))
        x_p = jnp.pad(x_p, ((0, pad), (0, 0)))
        len_col = jnp.pad(len_col, ((0, pad), (0, 0)))  # padded rows: len 0 -> att 0

    # ---- scoped-VMEM budget (defaults are 16/32 MiB; raise explicitly) ----
    weight_bytes = 4 * (S * H * _round_up(S * A, _LANE)
                        + S * A * _round_up(S, _LANE)
                        + 8 * _round_up(S * A, _LANE))
    budget = tb * per_row_bytes + 2 * weight_bytes
    vmem_limit = int(min(56 * (1 << 20),
                         max(32 * (1 << 20), int(budget * 1.3))))

    grid = (b_pad // tb,)
    grid_spec = pltpu.PrefetchScalarGridSpec(
        num_scalar_prefetch=0,
        grid=grid,
        in_specs=[
            pl.BlockSpec((tb, S * D), lambda i: (i, 0)),      # enc  (lane-dense)
            pl.BlockSpec((tb, S * H), lambda i: (i, 0)),      # x    (lane-dense)
            pl.BlockSpec((tb, 1),     lambda i: (i, 0)),      # lengths
            pl.BlockSpec((S * H, S * A), lambda i: (0, 0)),   # W_bd  (resident)
            pl.BlockSpec((1, S * A),     lambda i: (0, 0)),   # bias  (resident)
            pl.BlockSpec((S * A, S),     lambda i: (0, 0)),   # wa_bd (resident)
        ],
        out_specs=[
            pl.BlockSpec((tb, D), lambda i: (i, 0)),          # attended
            pl.BlockSpec((tb, S), lambda i: (i, 0)),          # softmax
        ],
    )

    attended, att = pl.pallas_call(
        attention_kernel,
        out_shape=(
            jax.ShapeDtypeStruct((b_pad, D), f32),
            jax.ShapeDtypeStruct((b_pad, S), f32),
        ),
        grid_spec=grid_spec,
        compiler_params=pltpu.CompilerParams(
            dimension_semantics=("parallel",),
            vmem_limit_bytes=vmem_limit),
    )(enc_p, x_p, len_col, w_bd, b_tiled, wa_bd)

    # TODO(synk): output lane-packing (4/16 batch rows per 128-wide output row)
    # is skipped: it needs an in-kernel sublane->lane relayout (risky reshape)
    # and the outputs are <8% of the HBM traffic here.
    return attended[:B], att[:B]


def reference_forward(enc_sents, x, len_s, w_lin, b_lin, w_att):
    emb = jnp.tanh(x @ w_lin + b_lin)
    att = (emb @ w_att)[..., 0]
    S = att.shape[1]
    mask = (jnp.arange(S)[None, :] < len_s[:, None]).astype(jnp.float32)
    e = jnp.exp(att) * mask
    soft = e / (e.sum(axis=1, keepdims=True) + 1e-4)
    attended = (soft[..., None] * enc_sents).sum(axis=1)
    return attended, soft


def xavier_uniform(key, shape, fan_in, fan_out):
    limit = (6.0 / (fan_in + fan_out)) ** 0.5
    return jax.random.uniform(key, shape, jnp.float32, -limit, limit)


if __name__ == "__main__":
    B, S, H, A = 2, 8, 32, 16
    D = H  # enc_sents feature dim (same hidden size as in the module's usage)

    key = jax.random.PRNGKey(0)
    k1, k2, k3, k4, k5 = jax.random.split(key, 5)

    enc_sents = jax.random.normal(k1, (B, S, D), jnp.float32)
    enc_sent_com_attent = jax.random.normal(k2, (B, S, H), jnp.float32)
    len_s = jnp.array([S, 5], dtype=jnp.int32)       # max(len_s) == S

    # deterministic Xavier-uniform init (init_xavier_uniform equivalent)
    w_lin = xavier_uniform(k3, (H, A), H, A)         # lin: Linear(H -> A)
    b_lin = 0.1 * jax.random.normal(k4, (1, A), jnp.float32)
    w_att = xavier_uniform(k5, (A, 1), A, 1)         # att_w: Linear(A -> 1, no bias)

    attended, att_soft = attention_forward(
        enc_sents, enc_sent_com_attent, len_s, w_lin, b_lin, w_att)
    jax.block_until_ready((attended, att_soft))

    ref_att, ref_soft = reference_forward(
        enc_sents, enc_sent_com_attent, len_s, w_lin, b_lin, w_att)
    assert jnp.allclose(attended, ref_att, atol=1e-4, rtol=1e-4), (
        float(jnp.max(jnp.abs(attended - ref_att))))
    assert jnp.allclose(att_soft, ref_soft, atol=1e-4, rtol=1e-4), (
        float(jnp.max(jnp.abs(att_soft - ref_soft))))

    print("KERNEL_OK")
</pallas_src>

<mosaic_0001>
module attributes {stable_mosaic.version = 11 : i64} {
  func.func @attention_kernel(%arg0: i32, %arg1: memref<8x256xf32, #tpu.memory_space<vmem>>, %arg2: memref<8x256xf32, #tpu.memory_space<vmem>>, %arg3: memref<8x1xi32, #tpu.memory_space<vmem>>, %arg4: memref<256x128xf32, #tpu.memory_space<vmem>>, %arg5: memref<1x128xf32, #tpu.memory_space<vmem>>, %arg6: memref<128x8xf32, #tpu.memory_space<vmem>>, %arg7: memref<8x32xf32, #tpu.memory_space<vmem>>, %arg8: memref<8x8xf32, #tpu.memory_space<vmem>>) attributes {dimension_semantics = [#tpu.dimension_semantics<parallel>], iteration_bounds = array<i64: 1>, scalar_prefetch = 0 : i64, scratch_operands = 0 : i64, tpu.core_type = #tpu.core_type<tc>, window_params = [{transform_indices = @transform_0, window_bounds = array<i64: 8, 256>}, {transform_indices = @transform_1, window_bounds = array<i64: 8, 256>}, {transform_indices = @transform_2, window_bounds = array<i64: 8, 1>}, {pipeline_mode = #tpu.pipeline_mode<synchronous>, transform_indices = @transform_3, window_bounds = array<i64: 256, 128>}, {pipeline_mode = #tpu.pipeline_mode<synchronous>, transform_indices = @transform_4, window_bounds = array<i64: 1, 128>}, {pipeline_mode = #tpu.pipeline_mode<synchronous>, transform_indices = @transform_5, window_bounds = array<i64: 128, 8>}, {transform_indices = @transform_6, window_bounds = array<i64: 8, 32>}, {transform_indices = @transform_7, window_bounds = array<i64: 8, 8>}]} {
    %c0 = arith.constant 0 : index
    %c0_0 = arith.constant 0 : index
    %0 = vector.load %arg2[%c0, %c0_0] : memref<8x256xf32, #tpu.memory_space<vmem>>, vector<8x256xf32>
    %c0_1 = arith.constant 0 : index
    %c0_2 = arith.constant 0 : index
    %1 = vector.load %arg4[%c0_1, %c0_2] : memref<256x128xf32, #tpu.memory_space<vmem>>, vector<256x128xf32>
    %cst = arith.constant dense<0.000000e+00> : vector<8x128xf32>
    %2 = tpu.matmul %0, %1, %cst {dimension_numbers = #tpu.dot_dimension_numbers<[1], [0], [0], [1], [0, 0, 1, 1], [], []>} : vector<8x256xf32>, vector<256x128xf32>, vector<8x128xf32> -> vector<8x128xf32>
    %c0_3 = arith.constant 0 : index
    %c0_4 = arith.constant 0 : index
    %3 = vector.load %arg5[%c0_3, %c0_4] : memref<1x128xf32, #tpu.memory_space<vmem>>, vector<1x128xf32>
    %4 = vector.broadcast %3 : vector<1x128xf32> to vector<8x128xf32>
    %5 = arith.addf %2, %4 : vector<8x128xf32>
    %6 = math.tanh %5 : vector<8x128xf32>
    %c0_5 = arith.constant 0 : index
    %c0_6 = arith.constant 0 : index
    %7 = vector.load %arg6[%c0_5, %c0_6] : memref<128x8xf32, #tpu.memory_space<vmem>>, vector<128x8xf32>
    %cst_7 = arith.constant dense<0.000000e+00> : vector<8x8xf32>
    %8 = tpu.matmul %6, %7, %cst_7 {dimension_numbers = #tpu.dot_dimension_numbers<[1], [0], [0], [1], [0, 0, 1, 1], [], []>} : vector<8x128xf32>, vector<128x8xf32>, vector<8x8xf32> -> vector<8x8xf32>
    %c0_8 = arith.constant 0 : index
    %c0_9 = arith.constant 0 : index
    %9 = vector.load %arg3[%c0_8, %c0_9] : memref<8x1xi32, #tpu.memory_space<vmem>>, vector<8x1xi32>
    %10 = tpu.iota {dimensions = array<i32: 1>} : vector<8x8xi32>
    %11 = vector.broadcast %9 : vector<8x1xi32> to vector<8x8xi32>
    %12 = arith.cmpi slt, %10, %11 : vector<8x8xi32>
    %13 = arith.extui %12 : vector<8x8xi1> to vector<8x8xi32>
    %14 = arith.sitofp %13 : vector<8x8xi32> to vector<8x8xf32>
    %15 = math.exp %8 : vector<8x8xf32>
    %16 = arith.mulf %15, %14 : vector<8x8xf32>
    %cst_10 = arith.constant dense<0.000000e+00> : vector<8xf32>
    %17 = vector.multi_reduction <add>, %16, %cst_10 [1] : vector<8x8xf32> to vector<8xf32>
    %18 = vector.shape_cast %17 : vector<8xf32> to vector<8x1xf32>
    %cst_11 = arith.constant 9.99999974E-5 : f32
    %19 = vector.broadcast %cst_11 : f32 to vector<8x1xf32>
    %20 = arith.addf %18, %19 : vector<8x1xf32>
    %21 = tpu.reciprocal %20 {approx = true} : vector<8x1xf32> -> vector<8x1xf32>
    %22 = arith.mulf %20, %21 : vector<8x1xf32>
    %cst_12 = arith.constant 2.000000e+00 : f32
    %23 = vector.broadcast %cst_12 : f32 to vector<8x1xf32>
    %24 = arith.subf %23, %22 : vector<8x1xf32>
    %25 = arith.mulf %21, %24 : vector<8x1xf32>
    %26 = vector.broadcast %25 : vector<8x1xf32> to vector<8x8xf32>
    %27 = arith.mulf %16, %26 : vector<8x8xf32>
    %c0_13 = arith.constant 0 : index
    %c0_14 = arith.constant 0 : index
    %28 = vector.load %arg8[%c0_13, %c0_14] : memref<8x8xf32, #tpu.memory_space<vmem>>, vector<8x8xf32>
    tpu.vector_store %arg8[%c0_13, %c0_14], %27 {strides = array<i32>} : memref<8x8xf32, #tpu.memory_space<vmem>>, vector<8x8xf32>,
    %c0_15 = arith.constant 0 : index
    %c0_16 = arith.constant 0 : index
    %29 = vector.load %arg1[%c0_15, %c0_16] : memref<8x256xf32, #tpu.memory_space<vmem>>, vector<8x256xf32>
    %30 = vector.extract_strided_slice %27 {offsets = [0, 0], sizes = [8, 1], strides = [1, 1]} : vector<8x8xf32> to vector<8x1xf32>
    %31 = vector.extract_strided_slice %29 {offsets = [0, 0], sizes = [8, 32], strides = [1, 1]} : vector<8x256xf32> to vector<8x32xf32>
    %32 = vector.broadcast %30 : vector<8x1xf32> to vector<8x32xf32>
    %33 = arith.mulf %32, %31 : vector<8x32xf32>
    %34 = vector.extract_strided_slice %27 {offsets = [0, 1], sizes = [8, 1], strides = [1, 1]} : vector<8x8xf32> to vector<8x1xf32>
    %35 = vector.extract_strided_slice %29 {offsets = [0, 32], sizes = [8, 32], strides = [1, 1]} : vector<8x256xf32> to vector<8x32xf32>
    %36 = vector.broadcast %34 : vector<8x1xf32> to vector<8x32xf32>
    %37 = arith.mulf %36, %35 : vector<8x32xf32>
    %38 = arith.addf %33, %37 : vector<8x32xf32>
    %39 = vector.extract_strided_slice %27 {offsets = [0, 2], sizes = [8, 1], strides = [1, 1]} : vector<8x8xf32> to vector<8x1xf32>
    %40 = vector.extract_strided_slice %29 {offsets = [0, 64], sizes = [8, 32], strides = [1, 1]} : vector<8x256xf32> to vector<8x32xf32>
    %41 = vector.broadcast %39 : vector<8x1xf32> to vector<8x32xf32>
    %42 = arith.mulf %41, %40 : vector<8x32xf32>
    %43 = arith.addf %38, %42 : vector<8x32xf32>
    %44 = vector.extract_strided_slice %27 {offsets = [0, 3], sizes = [8, 1], strides = [1, 1]} : vector<8x8xf32> to vector<8x1xf32>
    %45 = vector.extract_strided_slice %29 {offsets = [0, 96], sizes = [8, 32], strides = [1, 1]} : vector<8x256xf32> to vector<8x32xf32>
    %46 = vector.broadcast %44 : vector<8x1xf32> to vector<8x32xf32>
    %47 = arith.mulf %46, %45 : vector<8x32xf32>
    %48 = arith.addf %43, %47 : vector<8x32xf32>
    %49 = vector.extract_strided_slice %27 {offsets = [0, 4], sizes = [8, 1], strides = [1, 1]} : vector<8x8xf32> to vector<8x1xf32>
    %50 = vector.extract_strided_slice %29 {offsets = [0, 128], sizes = [8, 32], strides = [1, 1]} : vector<8x256xf32> to vector<8x32xf32>
    %51 = vector.broadcast %49 : vector<8x1xf32> to vector<8x32xf32>
    %52 = arith.mulf %51, %50 : vector<8x32xf32>
    %53 = arith.addf %48, %52 : vector<8x32xf32>
    %54 = vector.extract_strided_slice %27 {offsets = [0, 5], sizes = [8, 1], strides = [1, 1]} : vector<8x8xf32> to vector<8x1xf32>
    %55 = vector.extract_strided_slice %29 {offsets = [0, 160], sizes = [8, 32], strides = [1, 1]} : vector<8x256xf32> to vector<8x32xf32>
    %56 = vector.broadcast %54 : vector<8x1xf32> to vector<8x32xf32>
    %57 = arith.mulf %56, %55 : vector<8x32xf32>
    %58 = arith.addf %53, %57 : vector<8x32xf32>
    %59 = vector.extract_strided_slice %27 {offsets = [0, 6], sizes = [8, 1], strides = [1, 1]} : vector<8x8xf32> to vector<8x1xf32>
    %60 = vector.extract_strided_slice %29 {offsets = [0, 192], sizes = [8, 32], strides = [1, 1]} : vector<8x256xf32> to vector<8x32xf32>
    %61 = vector.broadcast %59 : vector<8x1xf32> to vector<8x32xf32>
    %62 = arith.mulf %61, %60 : vector<8x32xf32>
    %63 = arith.addf %58, %62 : vector<8x32xf32>
    %64 = vector.extract_strided_slice %27 {offsets = [0, 7], sizes = [8, 1], strides = [1, 1]} : vector<8x8xf32> to vector<8x1xf32>
    %65 = vector.extract_strided_slice %29 {offsets = [0, 224], sizes = [8, 32], strides = [1, 1]} : vector<8x256xf32> to vector<8x32xf32>
    %66 = vector.broadcast %64 : vector<8x1xf32> to vector<8x32xf32>
    %67 = arith.mulf %66, %65 : vector<8x32xf32>
    %68 = arith.addf %63, %67 : vector<8x32xf32>
    %c0_17 = arith.constant 0 : index
    %c0_18 = arith.constant 0 : index
    %69 = vector.load %arg7[%c0_17, %c0_18] : memref<8x32xf32, #tpu.memory_space<vmem>>, vector<8x32xf32>
    tpu.vector_store %arg7[%c0_17, %c0_18], %68 {strides = array<i32>} : memref<8x32xf32, #tpu.memory_space<vmem>>, vector<8x32xf32>,
    return
  }
  func.func @transform_0(%arg0: i32) -> (i32, i32) {
    %c0_i32 = arith.constant 0 : i32
    %c0_i32_0 = arith.constant 0 : i32
    return %arg0, %c0_i32 : i32, i32
  }
  func.func @transform_1(%arg0: i32) -> (i32, i32) {
    %c0_i32 = arith.constant 0 : i32
    %c0_i32_0 = arith.constant 0 : i32
    return %arg0, %c0_i32 : i32, i32
  }
  func.func @transform_2(%arg0: i32) -> (i32, i32) {
    %c0_i32 = arith.constant 0 : i32
    %c0_i32_0 = arith.constant 0 : i32
    return %arg0, %c0_i32 : i32, i32
  }
  func.func @transform_3(%arg0: i32) -> (i32, i32) {
    %c0_i32 = arith.constant 0 : i32
    %c0_i32_0 = arith.constant 0 : i32
    %c0_i32_1 = arith.constant 0 : i32
    return %c0_i32, %c0_i32_0 : i32, i32
  }
  func.func @transform_4(%arg0: i32) -> (i32, i32) {
    %c0_i32 = arith.constant 0 : i32
    %c0_i32_0 = arith.constant 0 : i32
    %c0_i32_1 = arith.constant 0 : i32
    return %c0_i32, %c0_i32_0 : i32, i32
  }
  func.func @transform_5(%arg0: i32) -> (i32, i32) {
    %c0_i32 = arith.constant 0 : i32
    %c0_i32_0 = arith.constant 0 : i32
    %c0_i32_1 = arith.constant 0 : i32
    return %c0_i32, %c0_i32_0 : i32, i32
  }
  func.func @transform_6(%arg0: i32) -> (i32, i32) {
    %c0_i32 = arith.constant 0 : i32
    %c0_i32_0 = arith.constant 0 : i32
    return %arg0, %c0_i32 : i32, i32
  }
  func.func @transform_7(%arg0: i32) -> (i32, i32) {
    %c0_i32 = arith.constant 0 : i32
    %c0_i32_0 = arith.constant 0 : i32
    return %arg0, %c0_i32 : i32, i32
  }
}

</mosaic_0001>

<llo_original>
// kernel: tpu_custom_call.1
$region0: #{tpu_custom_call.1}
  #allocation0 [shape = 'u32[]', space=smem, size = 0x4, offset = 0x4, fixed_abs, tag = 'smem constant byte address 0x4 - core index']
  #allocation1 [shape = 'u32[72,128]{1,0:T(1,128)}', space=vmem, size = 0x9000, scoped, tag = 'internal scratch']
  %s0 = inlined_call_operand.vmem [shape: f32[8,256], index: 0, kind: input, shape index: {}]
  %s1 = inlined_call_operand.vmem [shape: f32[8,256], index: 1, kind: input, shape index: {}]
  %s2 = inlined_call_operand.vmem [shape: s32[8,1], index: 2, kind: input, shape index: {}]
  %s3 = inlined_call_operand.hbm [shape: f32[256,128], index: 3, kind: input, shape index: {}]
  %s4 = inlined_call_operand.vmem [shape: f32[1,128], index: 4, kind: input, shape index: {}]
  %s5 = inlined_call_operand.vmem [shape: f32[128,8], index: 5, kind: input, shape index: {}]
  %s6 = inlined_call_operand.hbm [shape: f32[8,32], index: 6, kind: output, shape index: {0}]
  %s7 = inlined_call_operand.hbm [shape: f32[8,8], index: 7, kind: output, shape index: {1}]
  %8 = xla_tuple %s6, %s7
  %s9 = sld [smem:[#allocation0]]
  $region46: #{tpu_custom_call.1} parent=0
    _
  %s11 = ssub.s32 1, %s9
  %s12 = scalar_select 0, %s11, %s9
  $region1: #{tpu_custom_call.1} parent=0
    #allocation2 [shape = 'u8[131072]{0}', space=vmem, size = 0x20000, scoped, tag = 'input window, operand 3, single buffered']
    #allocation3 [shape = 's32[1]{0}', space=sflag, size = 0x4, scoped, tag = 'scoped memory for tpu_custom_call.1']
    #allocation4 [shape = 's32[1]{0}', space=sflag, size = 0x4, scoped, tag = 'scoped memory for tpu_custom_call.1']
    #allocation5 [shape = 'u8[4096]{0}', space=vmem, size = 0x1000, scoped, tag = 'output window, operand 0, single buffered']
    #allocation6 [shape = 'u8[4096]{0}', space=vmem, size = 0x1000, scoped, tag = 'output window, operand 1, single buffered']
    #allocation7 [shape = 's32[1]{0}', space=sflag, size = 0x4, scoped, tag = 'scoped memory for tpu_custom_call.1']
    %13 = vsyncpa [#allocation3], 0
    %14 = vsyncpa [#allocation4], 0
    %15 = vsyncpa [#allocation7], 0
    // Predicated region
    $region2: #{tpu_custom_call.1} parent=1 // pred_check
      _
    $region3: #{tpu_custom_call.1} parent=1 // pred_check_branch
      %17 = sbr.rel (0) target = $region5
    $region4: #{tpu_custom_call.1} parent=1 // pred_region
      _
    $region5: #{tpu_custom_call.1} parent=1 // pred_fallthru
      _
    // Predicated region
    $region6: #{tpu_custom_call.1} parent=1 // pred_check
      _
    $region7: #{tpu_custom_call.1} parent=1 // pred_check_branch
      %19 = sbr.rel (0) target = $region9
    $region8: #{tpu_custom_call.1} parent=1 // pred_region
      _
    $region9: #{tpu_custom_call.1} parent=1 // pred_fallthru
      _
    // Predicated region
    $region10: #{tpu_custom_call.1} parent=1 // pred_check
      _
    $region11: #{tpu_custom_call.1} parent=1 // pred_check_branch
      %21 = sbr.rel (0) target = $region13
    $region12: #{tpu_custom_call.1} parent=1 // pred_region
      _
    $region13: #{tpu_custom_call.1} parent=1 // pred_fallthru
      _
    // Predicated region
    $region14: #{tpu_custom_call.1} parent=1 // pred_check
      _
    $region15: #{tpu_custom_call.1} parent=1 // pred_check_branch
      %23 = sbr.rel (0) target = $region17
    $region16: #{tpu_custom_call.1} parent=1 // pred_region
      %25 = vsyncadd [#allocation3], 0
      %s26 = sshll.u32 %s3, 4
      %s27 = int_to_ptr.hbm [resolvable:$true] %s26
      %s28 = sshll.u32 [#allocation2], 4
      %s29 = int_to_ptr.vmem [resolvable:$true] %s28
      %34 = dma.hbm_to_vmem [thread:$0]  %s27, 4096, %s29, [#allocation3], 128, 128, 8
    $region17: #{tpu_custom_call.1} parent=1 // pred_fallthru
      _
    // Predicated region
    $region18: #{tpu_custom_call.1} parent=1 // pred_check
      _
    $region19: #{tpu_custom_call.1} parent=1 // pred_check_branch
      %36 = sbr.rel (0) target = $region21
    $region20: #{tpu_custom_call.1} parent=1 // pred_region
      _
    $region21: #{tpu_custom_call.1} parent=1 // pred_fallthru
      _
    // Predicated region
    $region22: #{tpu_custom_call.1} parent=1 // pred_check
      _
    $region23: #{tpu_custom_call.1} parent=1 // pred_check_branch
      %38 = sbr.rel (0) target = $region25
    $region24: #{tpu_custom_call.1} parent=1 // pred_region
      _
    $region25: #{tpu_custom_call.1} parent=1 // pred_fallthru
      _
    // Predicated region
    $region26: #{tpu_custom_call.1} parent=1 // pred_check
      _
    $region27: #{tpu_custom_call.1} parent=1 // pred_check_branch
      %40 = sbr.rel (0) target = $region29
    $region28: #{tpu_custom_call.1} parent=1 // pred_region
      %42 = dma.done [#allocation3], 4096
    $region29: #{tpu_custom_call.1} parent=1 // pred_fallthru
      _
    %v43 = vld [vmem:[%s1] sm:$0xff]
    %v44 = vld [vmem:[%s1 + $0x8] sm:$0xff]
    %v45 = vld [vmem:[#allocation2] sm:$0xff]
    %v46 = vld [vmem:[#allocation2 + $0x8] sm:$0xff]
    %v47 = vld [vmem:[#allocation2 + $0x10] sm:$0xff]
    %v48 = vld [vmem:[#allocation2 + $0x18] sm:$0xff]
    %v49 = vld [vmem:[#allocation2 + $0x20] sm:$0xff]
    %v50 = vld [vmem:[#allocation2 + $0x28] sm:$0xff]
    %v51 = vld [vmem:[#allocation2 + $0x30] sm:$0xff]
    %v52 = vld [vmem:[#allocation2 + $0x38] sm:$0xff]
    %v53 = vld [vmem:[#allocation2 + $0x40] sm:$0xff]
    %v54 = vld [vmem:[#allocation2 + $0x48] sm:$0xff]
    %v55 = vld [vmem:[#allocation2 + $0x50] sm:$0xff]
    %v56 = vld [vmem:[#allocation2 + $0x58] sm:$0xff]
    %v57 = vld [vmem:[#allocation2 + $0x60] sm:$0xff]
    %v58 = vld [vmem:[#allocation2 + $0x68] sm:$0xff]
    %v59 = vld [vmem:[#allocation2 + $0x70] sm:$0xff]
    %v60 = vld [vmem:[#allocation2 + $0x78] sm:$0xff]
    %v61 = vld [vmem:[#allocation2 + $0x80] sm:$0xff]
    %v62 = vld [vmem:[#allocation2 + $0x88] sm:$0xff]
    %v63 = vld [vmem:[#allocation2 + $0x90] sm:$0xff]
    %v64 = vld [vmem:[#allocation2 + $0x98] sm:$0xff]
    %v65 = vld [vmem:[#allocation2 + $0xa0] sm:$0xff]
    %v66 = vld [vmem:[#allocation2 + $0xa8] sm:$0xff]
    %v67 = vld [vmem:[#allocation2 + $0xb0] sm:$0xff]
    %v68 = vld [vmem:[#allocation2 + $0xb8] sm:$0xff]
    %v69 = vld [vmem:[#allocation2 + $0xc0] sm:$0xff]
    %v70 = vld [vmem:[#allocation2 + $0xc8] sm:$0xff]
    %v71 = vld [vmem:[#allocation2 + $0xd0] sm:$0xff]
    %v72 = vld [vmem:[#allocation2 + $0xd8] sm:$0xff]
    %v73 = vld [vmem:[#allocation2 + $0xe0] sm:$0xff]
    %v74 = vld [vmem:[#allocation2 + $0xe8] sm:$0xff]
    %v75 = vld [vmem:[#allocation2 + $0xf0] sm:$0xff]
    %v76 = vld [vmem:[#allocation2 + $0xf8] sm:$0xff]
    %v77 = vld [vmem:[%s4] sm:$0x1]
    %v79 = vperm.slane %v77, 0
    %81 = vmatpush.msra.mxu0 %v60
    %82 = vmatpush.msra.mxu0 %v59
    %83 = vmatpush.msra.mxu0 %v58
    %84 = vmatpush.msra.mxu0 %v57
    %85 = vmatpush.msra.mxu0 %v56
    %86 = vmatpush.msra.mxu0 %v55
    %87 = vmatpush.msra.mxu0 %v54
    %88 = vmatpush.msra.mxu0 %v53
    %89 = vmatpush.msra.mxu0 %v52
    %90 = vmatpush.msra.mxu0 %v51
    %91 = vmatpush.msra.mxu0 %v50
    %92 = vmatpush.msra.mxu0 %v49
    %93 = vmatpush.msra.mxu0 %v48
    %94 = vmatpush.msra.mxu0 %v47
    %95 = vmatpush.msra.mxu0 %v46
    %96 = vmatpush.msra.mxu0 %v45
    %97 = vmatmul.f32.gmra.mxu0 %v43
    %v98 = vpop.f32.mrf.mxu0
    %v99 = vadd.f32 %v79, %v98
    %100 = vdwg.mxu0
    %101 = vmatpush.msra.mxu0 %v76
    %102 = vmatpush.msra.mxu0 %v75
    %103 = vmatpush.msra.mxu0 %v74
    %104 = vmatpush.msra.mxu0 %v73
    %105 = vmatpush.msra.mxu0 %v72
    %106 = vmatpush.msra.mxu0 %v71
    %107 = vmatpush.msra.mxu0 %v70
    %108 = vmatpush.msra.mxu0 %v69
    %109 = vmatpush.msra.mxu0 %v68
    %110 = vmatpush.msra.mxu0 %v67
    %111 = vmatpush.msra.mxu0 %v66
    %112 = vmatpush.msra.mxu0 %v65
    %113 = vmatpush.msra.mxu0 %v64
    %114 = vmatpush.msra.mxu0 %v63
    %115 = vmatpush.msra.mxu0 %v62
    %116 = vmatpush.msra.mxu0 %v61
    %117 = vmatmul.f32.gmra.mxu0 %v44
    %v118 = vpop.f32.mrf.mxu0
    %v119 = vadd.f32 %v99, %v118
    %120 = vdwg.mxu0
    %v121 = vtanh.pop %v119
    %v122 = vld [vmem:[%s5] sm:$0xff]
    %v123 = vld [vmem:[%s5 + $0x8] sm:$0xff]
    %v124 = vld [vmem:[%s5 + $0x10] sm:$0xff]
    %v125 = vld [vmem:[%s5 + $0x18] sm:$0xff]
    %v126 = vld [vmem:[%s5 + $0x20] sm:$0xff]
    %v127 = vld [vmem:[%s5 + $0x28] sm:$0xff]
    %v128 = vld [vmem:[%s5 + $0x30] sm:$0xff]
    %v129 = vld [vmem:[%s5 + $0x38] sm:$0xff]
    %v130 = vld [vmem:[%s5 + $0x40] sm:$0xff]
    %v131 = vld [vmem:[%s5 + $0x48] sm:$0xff]
    %v132 = vld [vmem:[%s5 + $0x50] sm:$0xff]
    %v133 = vld [vmem:[%s5 + $0x58] sm:$0xff]
    %v134 = vld [vmem:[%s5 + $0x60] sm:$0xff]
    %v135 = vld [vmem:[%s5 + $0x68] sm:$0xff]
    %v136 = vld [vmem:[%s5 + $0x70] sm:$0xff]
    %v137 = vld [vmem:[%s5 + $0x78] sm:$0xff]
    %138 = vmatpush.msra.mxu0 %v137
    %139 = vmatpush.msra.mxu0 %v136
    %140 = vmatpush.msra.mxu0 %v135
    %141 = vmatpush.msra.mxu0 %v134
    %142 = vmatpush.msra.mxu0 %v133
    %143 = vmatpush.msra.mxu0 %v132
    %144 = vmatpush.msra.mxu0 %v131
    %145 = vmatpush.msra.mxu0 %v130
    %146 = vmatpush.msra.mxu0 %v129
    %147 = vmatpush.msra.mxu0 %v128
    %148 = vmatpush.msra.mxu0 %v127
    %149 = vmatpush.msra.mxu0 %v126
    %150 = vmatpush.msra.mxu0 %v125
    %151 = vmatpush.msra.mxu0 %v124
    %152 = vmatpush.msra.mxu0 %v123
    %153 = vmatpush.msra.mxu0 %v122
    %154 = vmatmul.f32.gmra.mxu0 %v121
    %v155 = vpop.f32.mrf.mxu0
    %v156 = vadd.f32 0.0, %v155
    %157 = vdwg.mxu0
    %v158 = vld [vmem:[%s2] sm:$0xff]
    %v159 = vlaneseq
    %v160 = vand.u32 %v159, 127
    %161 = vset.pattern.permute.xlu0 0
    %162 = vperm.xlu0 %161, %v158
    %v163 = vpop.permute.xlu0 %162
    %vm164 = vcmp.lt.s32.totalorder %v160, %v163
    %v165 = vsel %vm164, 1, 0
    %v166 = vcvt.s32.f32 %v165
    %v167 = vmul.f32 %v156, 1.442695
    %v168 = vpow.pop %v167
    %v169 = vmul.f32 %v168, %v166
    %vm170 = vcmask 64512
    %v171 = vsel %vm170, %v169, 0.0
    %172 = vadd.xlane.f32.xlu0 %v171
    %v173 = vpop.xlane.xlu0 %172
    %v174 = vadd.f32 %v173, 0.0001
    %v175 = vrcp.pop %v174
    %v176 = vmul.f32 %v174, %v175
    %v177 = vsub.f32 2.0, %v176
    %v178 = vmul.f32 %v175, %v177
    %v179 = vmul.f32 %v169, %v178
    %180 = vst.msk [vmem:[#allocation6] sm:$0xff] %vm170, %v179
    %v181 = vld [vmem:[%s0] sm:$0xff]
    %v182 = vld [vmem:[%s0 + $0x8] sm:$0xff]
    %184 = vset.pattern.permute.xlu0 0
    %185 = vperm.xlu0 %184, %v179
    %v186 = vpop.permute.xlu0 %185
    %v188 = vmul.f32 %v186, %v181
    %189 = vset.pattern.permute.xlu0 1
    %190 = vperm.xlu0 %189, %v179
    %v191 = vpop.permute.xlu0 %190
    %v193 = vmul.f32 %v191, %v181
    %195 = vrot.lane.b32.xlu0 %v193, 96
    %v196 = vpop.permute.xlu0 %195
    %v198 = vadd.f32 %v188, %v196
    %199 = vset.pattern.permute.xlu0 2
    %200 = vperm.xlu0 %199, %v179
    %v201 = vpop.permute.xlu0 %200
    %v203 = vmul.f32 %v201, %v181
    %205 = vrot.lane.b32.xlu0 %v203, 64
    %v206 = vpop.permute.xlu0 %205
    %v208 = vadd.f32 %v198, %v206
    %209 = vset.pattern.permute.xlu0 3
    %210 = vperm.xlu0 %209, %v179
    %v211 = vpop.permute.xlu0 %210
    %v213 = vmul.f32 %v211, %v181
    %215 = vrot.lane.b32.xlu0 %v213, 32
    %v216 = vpop.permute.xlu0 %215
    %v218 = vadd.f32 %v208, %v216
    %219 = vset.pattern.permute.xlu0 4
    %220 = vperm.xlu0 %219, %v179
    %v221 = vpop.permute.xlu0 %220
    %v223 = vmul.f32 %v221, %v182
    %v224 = vadd.f32 %v218, %v223
    %225 = vset.pattern.permute.xlu0 5
    %226 = vperm.xlu0 %225, %v179
    %v227 = vpop.permute.xlu0 %226
    %v229 = vmul.f32 %v227, %v182
    %231 = vrot.lane.b32.xlu0 %v229, 96
    %v232 = vpop.permute.xlu0 %231
    %v234 = vadd.f32 %v224, %v232
    %235 = vset.pattern.permute.xlu0 6
    %236 = vperm.xlu0 %235, %v179
    %v237 = vpop.permute.xlu0 %236
    %v239 = vmul.f32 %v237, %v182
    %241 = vrot.lane.b32.xlu0 %v239, 64
    %v242 = vpop.permute.xlu0 %241
    %v244 = vadd.f32 %v234, %v242
    %245 = vset.pattern.permute.xlu0 7
    %246 = vperm.xlu0 %245, %v179
    %v247 = vpop.permute.xlu0 %246
    %v249 = vmul.f32 %v247, %v182
    %251 = vrot.lane.b32.xlu0 %v249, 32
    %v252 = vpop.permute.xlu0 %251
    %v254 = vadd.f32 %v244, %v252
    %vm255 = vcmask 261120
    %256 = vst.msk [vmem:[#allocation5] sm:$0xff] %vm255, %v254
    // Predicated region
    $region30: #{tpu_custom_call.1} parent=1 // pred_check
      _
    $region31: #{tpu_custom_call.1} parent=1 // pred_check_branch
      %258 = sbr.rel (0) target = $region33
    $region32: #{tpu_custom_call.1} parent=1 // pred_region
      %260 = vsyncadd [#allocation4], 0
      %s262 = sshll.u32 [#allocation5], 4
      %s263 = int_to_ptr.vmem [resolvable:$true] %s262
      %s264 = sshll.u32 %s6, 4
      %s265 = int_to_ptr.hbm [resolvable:$true] %s264
      %267 = dma.vmem_to_hbm [thread:$0]  %s263, 128, %s265, [#allocation4]
    $region33: #{tpu_custom_call.1} parent=1 // pred_fallthru
      _
    // Predicated region
    $region34: #{tpu_custom_call.1} parent=1 // pred_check
      _
    $region35: #{tpu_custom_call.1} parent=1 // pred_check_branch
      %269 = sbr.rel (0) target = $region37
    $region36: #{tpu_custom_call.1} parent=1 // pred_region
      %271 = vsyncadd [#allocation7], 0
      %s273 = sshll.u32 [#allocation6], 4
      %s274 = int_to_ptr.vmem [resolvable:$true] %s273
      %s275 = sshll.u32 %s7, 4
      %s276 = int_to_ptr.hbm [resolvable:$true] %s275
      %278 = dma.vmem_to_hbm [thread:$0]  %s274, 128, %s276, [#allocation7]
    $region37: #{tpu_custom_call.1} parent=1 // pred_fallthru
      _
    // Predicated region
    $region38: #{tpu_custom_call.1} parent=1 // pred_check
      _
    $region39: #{tpu_custom_call.1} parent=1 // pred_check_branch
      %280 = sbr.rel (0) target = $region41
    $region40: #{tpu_custom_call.1} parent=1 // pred_region
      %282 = dma.done [#allocation4], 128
    $region41: #{tpu_custom_call.1} parent=1 // pred_fallthru
      _
    // Predicated region
    $region42: #{tpu_custom_call.1} parent=1 // pred_check
      _
    $region43: #{tpu_custom_call.1} parent=1 // pred_check_branch
      %284 = sbr.rel (0) target = $region45
    $region44: #{tpu_custom_call.1} parent=1 // pred_region
      %286 = dma.done [#allocation7], 128
    $region45: #{tpu_custom_call.1} parent=1 // pred_fallthru
      _
    %287 = vsyncpa [#allocation3], 1
    %288 = vsyncpa [#allocation4], 1
    %289 = vsyncpa [#allocation7], 1

</llo_original>
